<compile_context>
chip_gen: v5e
topology: v5e:2x2
jax: 0.10.0
libtpu: 0.0.40
codegen_flags: <defaults>
</compile_context>

<pallas_src>
import functools
from typing import Any, Optional, NamedTuple

import jax
import jax.numpy as jnp
from jax.experimental import pallas as pl
from jax.experimental.pallas import tpu as pltpu

DIM = 3
MAX_TILE_N = 64 * 1024            # rays (lanes) per grid step
_VMEM_LIMIT = 32 * 1024 * 1024    # explicit scoped-VMEM budget (safe on v5e/v6e/v7x)


def _sublanes_for(dtype) -> int:
    """Dense sublane packing factor for this dtype (8 for f32, 16 for bf16)."""
    return max(8, 32 // jnp.dtype(dtype).itemsize)


def _pad_and_tile(n_rays: int, subl: int):
    """Pick (n_pad, tile, grid) with n_pad = grid * tile and tile % (subl*128) == 0."""
    align = subl * 128
    n_al = max(align, ((n_rays + align - 1) // align) * align)
    grid = (n_al + MAX_TILE_N - 1) // MAX_TILE_N
    if grid == 1 and n_al >= 4 * align:
        grid = 2          # >= 2 parallel steps so v7x can use both TensorCores
    tile = ((((n_al + grid - 1) // grid) + align - 1) // align) * align
    return grid * tile, tile, grid


# ----------------------------------------------------------------------------
# Kernel 1 (generic): affine transform of rays stored as dense component slabs.
#   pt_ref/vt_ref : (DIM, subl, TL)  -- component d is a dense (subl, TL) block
#   out_ref       : (2*DIM, subl, TL) -- rows 0..2 = P', rows 3..5 = V'
#   out[d]   = A[d,0]*P0 + A[d,1]*P1 + A[d,2]*P2 + B[d]
#   out[3+d] = A[d,0]*V0 + A[d,1]*V1 + A[d,2]*V2
# A/B live in SMEM as 12 f32 scalars; every vector op is on a dense block (VPU).
# ----------------------------------------------------------------------------
def _direct_rays_kernel(ab_ref, pt_ref, vt_ref, out_ref):
    p0 = pt_ref[0].astype(jnp.float32)
    p1 = pt_ref[1].astype(jnp.float32)
    p2 = pt_ref[2].astype(jnp.float32)
    v0 = vt_ref[0].astype(jnp.float32)
    v1 = vt_ref[1].astype(jnp.float32)
    v2 = vt_ref[2].astype(jnp.float32)
    for d in range(DIM):
        a0 = ab_ref[3 * d + 0]
        a1 = ab_ref[3 * d + 1]
        a2 = ab_ref[3 * d + 2]
        b = ab_ref[9 + d]
        out_ref[d] = (a0 * p0 + a1 * p1 + a2 * p2 + b).astype(out_ref.dtype)
        out_ref[DIM + d] = (a0 * v0 + a1 * v1 + a2 * v2).astype(out_ref.dtype)


def direct_rays_pallas(A, B, P, V):
    """A: (3,3), B: (3,) in f32; P, V: (N, 3) rays. Returns transformed (N, 3) P, V."""
    N = P.shape[0]
    dtype = P.dtype
    subl = _sublanes_for(dtype)
    n_pad, tile, grid = _pad_and_tile(N, subl)
    cols = n_pad // subl
    tl = tile // subl

    def to_slab(X):
        # TODO(synk): a (dim, N)-layout optical pipeline would remove this
        # transpose + pad; the reshape below is a free (row-major) view.
        Xt = jnp.transpose(X).astype(dtype)                 # (3, N)
        if n_pad != N:
            Xt = jnp.pad(Xt, ((0, 0), (0, n_pad - N)))
        return Xt.reshape(DIM, subl, cols)

    pt = to_slab(P)
    vt = to_slab(V)
    ab = jnp.concatenate([A.astype(jnp.float32).reshape(-1),
                          B.astype(jnp.float32).reshape(-1)])          # (12,) f32

    itemsize = jnp.dtype(dtype).itemsize
    out = pl.pallas_call(
        _direct_rays_kernel,
        out_shape=jax.ShapeDtypeStruct((2 * DIM, subl, cols), dtype),
        grid_spec=pltpu.PrefetchScalarGridSpec(
            num_scalar_prefetch=0,
            grid=(grid,),
            in_specs=[
                pl.BlockSpec(memory_space=pltpu.MemorySpace.SMEM),     # A,B scalars
                pl.BlockSpec((DIM, subl, tl), lambda i: (0, 0, i)),    # P^T slab
                pl.BlockSpec((DIM, subl, tl), lambda i: (0, 0, i)),    # V^T slab
            ],
            out_specs=pl.BlockSpec((2 * DIM, subl, tl), lambda i: (0, 0, i)),
        ),
        compiler_params=pltpu.CompilerParams(
            dimension_semantics=("parallel",),
            vmem_limit_bytes=_VMEM_LIMIT),
        cost_estimate=pl.CostEstimate(
            flops=36 * n_pad, transcendentals=0,
            bytes_accessed=int(4 * DIM * n_pad * itemsize + 48)),
    )(ab, pt, vt)

    out2 = out.reshape(2 * DIM, n_pad)
    # TODO(synk): transpose back to the (N, dim) module contract is XLA glue; keeping
    # (dim, N) through the pipeline (or aliasing into the concat target) removes it.
    P_out = jnp.transpose(out2[:DIM, :N])
    V_out = jnp.transpose(out2[DIM:, :N])
    return P_out, V_out


# ----------------------------------------------------------------------------
# Kernel 2 (fused sampler + transform) for ParallelBeamSource:
# generates the x-y beam grid in-register from the exact int32 ray index, so the
# kernel has NO P/V HBM inputs -- its only HBM traffic is the dense output slab.
# ----------------------------------------------------------------------------
def _parallel_beam_kernel(ab_ref, out_ref, *, side, half, step,
                          cols_total, tile_cols, subl):
    i = pl.program_id(0)
    s_iota = jax.lax.broadcasted_iota(jnp.int32, (subl, tile_cols), 0)
    l_iota = jax.lax.broadcasted_iota(jnp.int32, (subl, tile_cols), 1)
    n = s_iota * cols_total + i * tile_cols + l_iota        # exact int32 flat ray index

    # (gi, gj) = (n // side, n % side) without vector integer division:
    # f32 estimate of the quotient, exact int32 remainder, single +/-1 correction.
    gi = jnp.floor((n.astype(jnp.float32) + 0.5) * (1.0 / side)).astype(jnp.int32)
    gj = n - gi * side
    over = gj >= side
    under = gj < 0
    gi = jnp.where(over, gi + 1, gi)
    gj = jnp.where(over, gj - side, gj)
    gi = jnp.where(under, gi - 1, gi)
    gj = jnp.where(under, gj + side, gj)

    x = gi.astype(jnp.float32) * step - half                # beam-grid x coordinate
    y = gj.astype(jnp.float32) * step - half                # beam-grid y coordinate
    ones = jnp.ones((subl, tile_cols), jnp.float32)

    for d in range(DIM):
        a0 = ab_ref[3 * d + 0]
        a1 = ab_ref[3 * d + 1]
        a2 = ab_ref[3 * d + 2]
        b = ab_ref[9 + d]
        # P = (x, y, 0)  ->  P'[d] = A[d,0]*x + A[d,1]*y + B[d]
        out_ref[d] = (a0 * x + a1 * y + b).astype(out_ref.dtype)
        # V = (0, 0, 1)  ->  V'[d] = A[d,2]
        out_ref[DIM + d] = (a2 * ones).astype(out_ref.dtype)


def parallel_beam_rays_pallas(A, B, n_rays, side, half, dtype):
    subl = _sublanes_for(dtype)
    n_pad, tile, grid = _pad_and_tile(n_rays, subl)
    cols = n_pad // subl
    tl = tile // subl
    step = (2.0 * half) / (side - 1) if side > 1 else 0.0
    ab = jnp.concatenate([A.astype(jnp.float32).reshape(-1),
                          B.astype(jnp.float32).reshape(-1)])          # (12,) f32
    kernel = functools.partial(
        _parallel_beam_kernel, side=int(side), half=float(half), step=float(step),
        cols_total=cols, tile_cols=tl, subl=subl)
    itemsize = jnp.dtype(dtype).itemsize
    out = pl.pallas_call(
        kernel,
        out_shape=jax.ShapeDtypeStruct((2 * DIM, subl, cols), dtype),
        grid_spec=pltpu.PrefetchScalarGridSpec(
            num_scalar_prefetch=0,
            grid=(grid,),
            in_specs=[pl.BlockSpec(memory_space=pltpu.MemorySpace.SMEM)],
            out_specs=pl.BlockSpec((2 * DIM, subl, tl), lambda i: (0, 0, i)),
        ),
        compiler_params=pltpu.CompilerParams(
            dimension_semantics=("parallel",),
            vmem_limit_bytes=_VMEM_LIMIT),
        cost_estimate=pl.CostEstimate(
            flops=30 * n_pad, transcendentals=0,
            bytes_accessed=int(2 * DIM * n_pad * itemsize + 48)),
    )(ab)
    out2 = out.reshape(2 * DIM, n_pad)
    P = jnp.transpose(out2[:DIM, :n_rays])
    V = jnp.transpose(out2[DIM:, :n_rays])
    return P, V


# ----------------------------------------------------------------------------
# Plain-JAX glue reproducing the surrounding module plumbing
# ----------------------------------------------------------------------------
class OpticalData(NamedTuple):
    P: jnp.ndarray                       # (N, dim) ray origins
    V: jnp.ndarray                       # (N, dim) ray directions
    rays_base: Optional[jnp.ndarray]
    rays_object: Optional[jnp.ndarray]
    var_base: Optional[jnp.ndarray]
    var_object: Optional[jnp.ndarray]
    sampling: dict
    transforms: tuple                    # sequence of (A, B) affine transforms
    dim: int
    dtype: Any
    material: Any

    def replace(self, **kw):
        return self._replace(**kw)


def get_material_model(material):
    # TODO(synk): full dispersive MaterialModel has no compute in this forward;
    # represented as a plain record here.
    if isinstance(material, dict):
        return material
    return {"name": material, "refractive_index": 1.0 if material == "air" else 1.5}


def cat_optional(a, b):
    if a is None and b is None:
        return None
    if a is None:
        return b
    if b is None:
        return a
    return jnp.concatenate((a, b), axis=0)


def forward_kinematic(transforms):
    """Compose a chain of affine transforms x -> A x + B, applied in order. f32 throughout."""
    A = jnp.eye(DIM, dtype=jnp.float32)
    B = jnp.zeros((DIM,), dtype=jnp.float32)
    for (Ai, Bi) in transforms:
        Ai = Ai.astype(jnp.float32)
        Bi = Bi.astype(jnp.float32)
        A = Ai @ A                 # new(x) = Ai (A x + B) + Bi
        B = Ai @ B + Bi
    return A, B


class LightSourceBase:
    def __init__(self, material="air"):
        self.material = get_material_model(material)

    def sample_light_source(self, sampling, dim, dtype):
        raise NotImplementedError

    def sample_and_direct_rays(self, sampling, dim, dtype, A, B):
        """Optional fused sample+transform path. Return None to use the generic path."""
        return None

    def forward(self, inputs: OpticalData) -> OpticalData:
        dim, dtype = inputs.dim, inputs.dtype
        A, B = forward_kinematic(inputs.transforms)

        fused = self.sample_and_direct_rays(inputs.sampling, dim, dtype, A, B)
        if fused is not None:
            P, V, rays_base, rays_object, var_base, var_object = fused
        else:
            P, V, rays_base, rays_object, var_base, var_object = \
                self.sample_light_source(inputs.sampling, dim, dtype)
            P, V = direct_rays_pallas(A, B, P, V)        # generic Pallas hot path

        return inputs.replace(
            P=jnp.concatenate((inputs.P, P.astype(dtype)), axis=0),
            V=jnp.concatenate((inputs.V, V.astype(dtype)), axis=0),
            rays_base=cat_optional(inputs.rays_base, rays_base),
            rays_object=cat_optional(inputs.rays_object, rays_object),
            var_base=var_base,
            var_object=var_object,
            material=self.material,
        )


class ParallelBeamSource(LightSourceBase):
    """Deterministic sampler: a parallel beam along +z on an x-y grid."""

    def _grid_params(self, sampling):
        N = int(sampling["N"])
        half = float(sampling.get("beam_half_width", 1.0))
        side = int(round(N ** 0.5))
        assert side * side == N
        return N, side, half

    def sample_light_source(self, sampling, dim, dtype):
        N, side, half = self._grid_params(sampling)
        xs = jnp.linspace(-half, half, side, dtype=dtype)
        gx, gy = jnp.meshgrid(xs, xs, indexing="ij")
        P = jnp.stack([gx.ravel(), gy.ravel(), jnp.zeros((N,), dtype=dtype)], axis=1)
        V = jnp.tile(jnp.array([[0.0, 0.0, 1.0]], dtype=dtype), (N, 1))
        rays_base = jnp.stack([gx.ravel(), gy.ravel()], axis=1)
        rays_object = jnp.zeros((N, 2), dtype=dtype)
        return P, V, rays_base, rays_object, None, None

    def sample_and_direct_rays(self, sampling, dim, dtype, A, B):
        N, side, half = self._grid_params(sampling)
        # Fused Pallas path: no P/V HBM inputs at all.
        P, V = parallel_beam_rays_pallas(A, B, N, side, half, dtype)
        # base/object coordinates are small (2 components/ray) plain-JAX glue.
        xs = jnp.linspace(-half, half, side, dtype=dtype)
        gx, gy = jnp.meshgrid(xs, xs, indexing="ij")
        rays_base = jnp.stack([gx.ravel(), gy.ravel()], axis=1)
        rays_object = jnp.zeros((N, 2), dtype=dtype)
        return P, V, rays_base, rays_object, None, None


# ----------------------------------------------------------------------------
# Demo / self-check
# ----------------------------------------------------------------------------
if __name__ == "__main__":
    key = jax.random.PRNGKey(0)
    dtype = jnp.float32
    dim = DIM

    # Existing rays already in the optical pipeline.
    N_existing = 8
    k1, k2 = jax.random.split(key)
    P_in = jax.random.normal(k1, (N_existing, dim), dtype=dtype)
    V_in = jax.random.normal(k2, (N_existing, dim), dtype=dtype)
    rays_base_in = jnp.zeros((N_existing, 2), dtype=dtype)
    rays_object_in = jnp.zeros((N_existing, 2), dtype=dtype)

    # Deterministic kinematic chain: rotation about z, then a translation.
    theta = 0.3
    c, s = jnp.cos(theta), jnp.sin(theta)
    A_rot = jnp.array([[c, -s, 0.0], [s, c, 0.0], [0.0, 0.0, 1.0]], dtype=jnp.float32)
    B_rot = jnp.zeros((dim,), dtype=jnp.float32)
    A_id = jnp.eye(dim, dtype=jnp.float32)
    B_tr = jnp.array([0.5, -0.25, 2.0], dtype=jnp.float32)
    transforms = ((A_rot, B_rot), (A_id, B_tr))

    sampling = {"N": 256, "beam_half_width": 1.0}   # 256 new rays (16x16 beam grid)

    inputs = OpticalData(
        P=P_in, V=V_in,
        rays_base=rays_base_in, rays_object=rays_object_in,
        var_base=None, var_object=None,
        sampling=sampling, transforms=transforms,
        dim=dim, dtype=dtype, material=get_material_model("air"),
    )

    source = ParallelBeamSource(material="air")
    out = source.forward(inputs)                    # fused-sampling Pallas path
    jax.block_until_ready(out.P)
    jax.block_until_ready(out.V)

    # Pure-JAX reference.
    Ps, Vs, *_ = source.sample_light_source(sampling, dim, dtype)
    A_c, B_c = forward_kinematic(transforms)
    P_ref = Ps @ A_c.T + B_c
    V_ref = Vs @ A_c.T

    assert out.P.shape == (N_existing + sampling["N"], dim)
    assert out.V.shape == (N_existing + sampling["N"], dim)
    assert out.rays_base.shape == (N_existing + sampling["N"], 2)
    assert jnp.allclose(out.P[:N_existing], P_in)
    assert jnp.allclose(out.V[:N_existing], V_in)
    assert jnp.allclose(out.P[N_existing:], P_ref, atol=1e-5)
    assert jnp.allclose(out.V[N_existing:], V_ref, atol=1e-5)

    # Also exercise the generic (non-fused) direct_rays kernel.
    Pg, Vg = direct_rays_pallas(A_c, B_c, Ps, Vs)
    jax.block_until_ready(Pg)
    jax.block_until_ready(Vg)
    assert jnp.allclose(Pg, P_ref, atol=1e-5)
    assert jnp.allclose(Vg, V_ref, atol=1e-5)

    print("KERNEL_OK")
</pallas_src>

<mosaic_0001>
module attributes {stable_mosaic.version = 11 : i64} {
  func.func @_parallel_beam_kernel(%arg0: i32, %arg1: memref<12xf32, #tpu.memory_space<smem>>, %arg2: memref<6x8x128xf32, #tpu.memory_space<vmem>>) attributes {dimension_semantics = [#tpu.dimension_semantics<parallel>], iteration_bounds = array<i64: 1>, scalar_prefetch = 0 : i64, scratch_operands = 0 : i64, tpu.core_type = #tpu.core_type<tc>, window_params = [{transform_indices = @transform_0, window_bounds = array<i64: 12>}, {transform_indices = @transform_1, window_bounds = array<i64: 6, 8, 128>}]} {
    %0 = tpu.iota {dimensions = array<i32: 0>} : vector<8x128xi32>
    %1 = tpu.iota {dimensions = array<i32: 1>} : vector<8x128xi32>
    %c128_i32 = arith.constant 128 : i32
    %2 = vector.broadcast %c128_i32 : i32 to vector<8x128xi32>
    %3 = arith.muli %0, %2 : vector<8x128xi32>
    %c128_i32_0 = arith.constant 128 : i32
    %4 = arith.muli %arg0, %c128_i32_0 : i32
    %5 = vector.broadcast %4 : i32 to vector<8x128xi32>
    %6 = arith.addi %3, %5 : vector<8x128xi32>
    %7 = arith.addi %6, %1 : vector<8x128xi32>
    %8 = arith.sitofp %7 : vector<8x128xi32> to vector<8x128xf32>
    %cst = arith.constant 5.000000e-01 : f32
    %9 = vector.broadcast %cst : f32 to vector<8x128xf32>
    %10 = arith.addf %8, %9 : vector<8x128xf32>
    %cst_1 = arith.constant 6.250000e-02 : f32
    %11 = vector.broadcast %cst_1 : f32 to vector<8x128xf32>
    %12 = arith.mulf %10, %11 : vector<8x128xf32>
    %13 = math.floor %12 : vector<8x128xf32>
    %14 = arith.fptosi %13 : vector<8x128xf32> to vector<8x128xi32>
    %c16_i32 = arith.constant 16 : i32
    %15 = vector.broadcast %c16_i32 : i32 to vector<8x128xi32>
    %16 = arith.muli %14, %15 : vector<8x128xi32>
    %17 = arith.subi %7, %16 : vector<8x128xi32>
    %c16_i32_2 = arith.constant 16 : i32
    %18 = vector.broadcast %c16_i32_2 : i32 to vector<8x128xi32>
    %19 = arith.cmpi sge, %17, %18 : vector<8x128xi32>
    %c0_i32 = arith.constant 0 : i32
    %20 = vector.broadcast %c0_i32 : i32 to vector<8x128xi32>
    %21 = arith.cmpi slt, %17, %20 : vector<8x128xi32>
    %c1_i32 = arith.constant 1 : i32
    %22 = vector.broadcast %c1_i32 : i32 to vector<8x128xi32>
    %23 = arith.addi %14, %22 : vector<8x128xi32>
    %24 = arith.select %19, %23, %14 : vector<8x128xi1>, vector<8x128xi32>
    %c16_i32_3 = arith.constant 16 : i32
    %25 = vector.broadcast %c16_i32_3 : i32 to vector<8x128xi32>
    %26 = arith.subi %17, %25 : vector<8x128xi32>
    %27 = arith.select %19, %26, %17 : vector<8x128xi1>, vector<8x128xi32>
    %c1_i32_4 = arith.constant 1 : i32
    %28 = vector.broadcast %c1_i32_4 : i32 to vector<8x128xi32>
    %29 = arith.subi %24, %28 : vector<8x128xi32>
    %30 = arith.select %21, %29, %24 : vector<8x128xi1>, vector<8x128xi32>
    %c16_i32_5 = arith.constant 16 : i32
    %31 = vector.broadcast %c16_i32_5 : i32 to vector<8x128xi32>
    %32 = arith.addi %27, %31 : vector<8x128xi32>
    %33 = arith.select %21, %32, %27 : vector<8x128xi1>, vector<8x128xi32>
    %34 = arith.sitofp %30 : vector<8x128xi32> to vector<8x128xf32>
    %cst_6 = arith.constant 0.13333334 : f32
    %35 = vector.broadcast %cst_6 : f32 to vector<8x128xf32>
    %36 = arith.mulf %34, %35 : vector<8x128xf32>
    %cst_7 = arith.constant 1.000000e+00 : f32
    %37 = vector.broadcast %cst_7 : f32 to vector<8x128xf32>
    %38 = arith.subf %36, %37 : vector<8x128xf32>
    %39 = arith.sitofp %33 : vector<8x128xi32> to vector<8x128xf32>
    %cst_8 = arith.constant 0.13333334 : f32
    %40 = vector.broadcast %cst_8 : f32 to vector<8x128xf32>
    %41 = arith.mulf %39, %40 : vector<8x128xf32>
    %cst_9 = arith.constant 1.000000e+00 : f32
    %42 = vector.broadcast %cst_9 : f32 to vector<8x128xf32>
    %43 = arith.subf %41, %42 : vector<8x128xf32>
    %cst_10 = arith.constant 1.000000e+00 : f32
    %44 = vector.broadcast %cst_10 : f32 to vector<8x128xf32>
    %c0 = arith.constant 0 : index
    %45 = memref.load %arg1[%c0] : memref<12xf32, #tpu.memory_space<smem>>
    %c1 = arith.constant 1 : index
    %46 = memref.load %arg1[%c1] : memref<12xf32, #tpu.memory_space<smem>>
    %c2 = arith.constant 2 : index
    %47 = memref.load %arg1[%c2] : memref<12xf32, #tpu.memory_space<smem>>
    %c9 = arith.constant 9 : index
    %48 = memref.load %arg1[%c9] : memref<12xf32, #tpu.memory_space<smem>>
    %49 = vector.broadcast %45 : f32 to vector<8x128xf32>
    %50 = arith.mulf %49, %38 : vector<8x128xf32>
    %51 = vector.broadcast %46 : f32 to vector<8x128xf32>
    %52 = arith.mulf %51, %43 : vector<8x128xf32>
    %53 = arith.addf %50, %52 : vector<8x128xf32>
    %54 = vector.broadcast %48 : f32 to vector<8x128xf32>
    %55 = arith.addf %53, %54 : vector<8x128xf32>
    %c0_11 = arith.constant 0 : index
    %c0_12 = arith.constant 0 : index
    %c0_13 = arith.constant 0 : index
    %56 = vector.load %arg2[%c0_11, %c0_12, %c0_13] : memref<6x8x128xf32, #tpu.memory_space<vmem>>, vector<1x8x128xf32>
    %57 = vector.shape_cast %56 : vector<1x8x128xf32> to vector<8x128xf32>
    %58 = vector.shape_cast %55 : vector<8x128xf32> to vector<1x8x128xf32>
    tpu.vector_store %arg2[%c0_11, %c0_12, %c0_13], %58 {strides = array<i32>} : memref<6x8x128xf32, #tpu.memory_space<vmem>>, vector<1x8x128xf32>,
    %59 = vector.broadcast %47 : f32 to vector<8x128xf32>
    %60 = arith.mulf %59, %44 : vector<8x128xf32>
    %c3 = arith.constant 3 : index
    %c0_14 = arith.constant 0 : index
    %c0_15 = arith.constant 0 : index
    %61 = vector.load %arg2[%c3, %c0_14, %c0_15] : memref<6x8x128xf32, #tpu.memory_space<vmem>>, vector<1x8x128xf32>
    %62 = vector.shape_cast %61 : vector<1x8x128xf32> to vector<8x128xf32>
    %63 = vector.shape_cast %60 : vector<8x128xf32> to vector<1x8x128xf32>
    tpu.vector_store %arg2[%c3, %c0_14, %c0_15], %63 {strides = array<i32>} : memref<6x8x128xf32, #tpu.memory_space<vmem>>, vector<1x8x128xf32>,
    %c3_16 = arith.constant 3 : index
    %64 = memref.load %arg1[%c3_16] : memref<12xf32, #tpu.memory_space<smem>>
    %c4 = arith.constant 4 : index
    %65 = memref.load %arg1[%c4] : memref<12xf32, #tpu.memory_space<smem>>
    %c5 = arith.constant 5 : index
    %66 = memref.load %arg1[%c5] : memref<12xf32, #tpu.memory_space<smem>>
    %c10 = arith.constant 10 : index
    %67 = memref.load %arg1[%c10] : memref<12xf32, #tpu.memory_space<smem>>
    %68 = vector.broadcast %64 : f32 to vector<8x128xf32>
    %69 = arith.mulf %68, %38 : vector<8x128xf32>
    %70 = vector.broadcast %65 : f32 to vector<8x128xf32>
    %71 = arith.mulf %70, %43 : vector<8x128xf32>
    %72 = arith.addf %69, %71 : vector<8x128xf32>
    %73 = vector.broadcast %67 : f32 to vector<8x128xf32>
    %74 = arith.addf %72, %73 : vector<8x128xf32>
    %c1_17 = arith.constant 1 : index
    %c0_18 = arith.constant 0 : index
    %c0_19 = arith.constant 0 : index
    %75 = vector.load %arg2[%c1_17, %c0_18, %c0_19] : memref<6x8x128xf32, #tpu.memory_space<vmem>>, vector<1x8x128xf32>
    %76 = vector.shape_cast %75 : vector<1x8x128xf32> to vector<8x128xf32>
    %77 = vector.shape_cast %74 : vector<8x128xf32> to vector<1x8x128xf32>
    tpu.vector_store %arg2[%c1_17, %c0_18, %c0_19], %77 {strides = array<i32>} : memref<6x8x128xf32, #tpu.memory_space<vmem>>, vector<1x8x128xf32>,
    %78 = vector.broadcast %66 : f32 to vector<8x128xf32>
    %79 = arith.mulf %78, %44 : vector<8x128xf32>
    %c4_20 = arith.constant 4 : index
    %c0_21 = arith.constant 0 : index
    %c0_22 = arith.constant 0 : index
    %80 = vector.load %arg2[%c4_20, %c0_21, %c0_22] : memref<6x8x128xf32, #tpu.memory_space<vmem>>, vector<1x8x128xf32>
    %81 = vector.shape_cast %80 : vector<1x8x128xf32> to vector<8x128xf32>
    %82 = vector.shape_cast %79 : vector<8x128xf32> to vector<1x8x128xf32>
    tpu.vector_store %arg2[%c4_20, %c0_21, %c0_22], %82 {strides = array<i32>} : memref<6x8x128xf32, #tpu.memory_space<vmem>>, vector<1x8x128xf32>,
    %c6 = arith.constant 6 : index
    %83 = memref.load %arg1[%c6] : memref<12xf32, #tpu.memory_space<smem>>
    %c7 = arith.constant 7 : index
    %84 = memref.load %arg1[%c7] : memref<12xf32, #tpu.memory_space<smem>>
    %c8 = arith.constant 8 : index
    %85 = memref.load %arg1[%c8] : memref<12xf32, #tpu.memory_space<smem>>
    %c11 = arith.constant 11 : index
    %86 = memref.load %arg1[%c11] : memref<12xf32, #tpu.memory_space<smem>>
    %87 = vector.broadcast %83 : f32 to vector<8x128xf32>
    %88 = arith.mulf %87, %38 : vector<8x128xf32>
    %89 = vector.broadcast %84 : f32 to vector<8x128xf32>
    %90 = arith.mulf %89, %43 : vector<8x128xf32>
    %91 = arith.addf %88, %90 : vector<8x128xf32>
    %92 = vector.broadcast %86 : f32 to vector<8x128xf32>
    %93 = arith.addf %91, %92 : vector<8x128xf32>
    %c2_23 = arith.constant 2 : index
    %c0_24 = arith.constant 0 : index
    %c0_25 = arith.constant 0 : index
    %94 = vector.load %arg2[%c2_23, %c0_24, %c0_25] : memref<6x8x128xf32, #tpu.memory_space<vmem>>, vector<1x8x128xf32>
    %95 = vector.shape_cast %94 : vector<1x8x128xf32> to vector<8x128xf32>
    %96 = vector.shape_cast %93 : vector<8x128xf32> to vector<1x8x128xf32>
    tpu.vector_store %arg2[%c2_23, %c0_24, %c0_25], %96 {strides = array<i32>} : memref<6x8x128xf32, #tpu.memory_space<vmem>>, vector<1x8x128xf32>,
    %97 = vector.broadcast %85 : f32 to vector<8x128xf32>
    %98 = arith.mulf %97, %44 : vector<8x128xf32>
    %c5_26 = arith.constant 5 : index
    %c0_27 = arith.constant 0 : index
    %c0_28 = arith.constant 0 : index
    %99 = vector.load %arg2[%c5_26, %c0_27, %c0_28] : memref<6x8x128xf32, #tpu.memory_space<vmem>>, vector<1x8x128xf32>
    %100 = vector.shape_cast %99 : vector<1x8x128xf32> to vector<8x128xf32>
    %101 = vector.shape_cast %98 : vector<8x128xf32> to vector<1x8x128xf32>
    tpu.vector_store %arg2[%c5_26, %c0_27, %c0_28], %101 {strides = array<i32>} : memref<6x8x128xf32, #tpu.memory_space<vmem>>, vector<1x8x128xf32>,
    return
  }
  func.func @transform_0(%arg0: i32) -> i32 {
    %c0_i32 = arith.constant 0 : i32
    %c0_i32_0 = arith.constant 0 : i32
    return %c0_i32 : i32
  }
  func.func @transform_1(%arg0: i32) -> (i32, i32, i32) {
    %c0_i32 = arith.constant 0 : i32
    %c0_i32_0 = arith.constant 0 : i32
    %c0_i32_1 = arith.constant 0 : i32
    return %c0_i32, %c0_i32_0, %arg0 : i32, i32, i32
  }
}

</mosaic_0001>

<llo_original>
// kernel: tpu_custom_call.1
$region0: #{tpu_custom_call.1}
  #allocation0 [shape = 'u32[]', space=smem, size = 0x4, offset = 0x4, fixed_abs, tag = 'smem constant byte address 0x4 - core index']
  #allocation1 [shape = 'u32[72,128]{1,0:T(1,128)}', space=vmem, size = 0x9000, scoped, tag = 'internal scratch']
  %s0 = inlined_call_operand.hbm [shape: f32[12], index: 0, kind: input, shape index: {}]
  %s1 = inlined_call_operand.hbm [shape: f32[6,8,128], index: 1, kind: output, shape index: {}]
  %s2 = sld [smem:[#allocation0]]
  $region18: #{tpu_custom_call.1} parent=0
    _
  %s4 = ssub.s32 1, %s2
  %s5 = scalar_select 0, %s4, %s2
  $region1: #{tpu_custom_call.1} parent=0
    #allocation2 [shape = 'u8[512]{0}', space=smem, size = 0x200, scoped, tag = 'input window, operand 0, single buffered']
    #allocation3 [shape = 's32[1]{0}', space=sflag, size = 0x4, scoped, tag = 'scoped memory for tpu_custom_call.1']
    #allocation4 [shape = 's32[1]{0}', space=sflag, size = 0x4, scoped, tag = 'scoped memory for tpu_custom_call.1']
    #allocation5 [shape = 'u8[24576]{0}', space=vmem, size = 0x6000, scoped, tag = 'output window, operand 0, single buffered']
    %6 = vsyncpa [#allocation4], 0
    %7 = vsyncpa [#allocation3], 0
    // Predicated region
    $region2: #{tpu_custom_call.1} parent=1 // pred_check
      _
    $region3: #{tpu_custom_call.1} parent=1 // pred_check_branch
      %9 = sbr.rel (0) target = $region5
    $region4: #{tpu_custom_call.1} parent=1 // pred_region
      %11 = vsyncadd [#allocation4], 0
      %s13 = sshll.u32 %s0, 4
      %s14 = int_to_ptr.hbm [resolvable:$true] %s13
      %16 = dma.hbm_to_smem %s14, 16, [#allocation2], [#allocation4]
    $region5: #{tpu_custom_call.1} parent=1 // pred_fallthru
      _
    // Predicated region
    $region6: #{tpu_custom_call.1} parent=1 // pred_check
      _
    $region7: #{tpu_custom_call.1} parent=1 // pred_check_branch
      %18 = sbr.rel (0) target = $region9
    $region8: #{tpu_custom_call.1} parent=1 // pred_region
      %20 = dma.done [#allocation4], 16
    $region9: #{tpu_custom_call.1} parent=1 // pred_fallthru
      _
    %21 = sfence
    %v22 = vlaneseq
    %v23 = vshrl.u32 %v22, 7
    %v24 = vlaneseq
    %v25 = vand.u32 %v24, 127
    %v26 = vmul.u32 %v23, 128
    %s27 = smul.u32 0, 128
    %v28 = vstv %s27
    %v29 = vadd.s32 %v26, %v28
    %v30 = vadd.s32 %v29, %v25
    %v31 = vcvt.s32.f32 %v30
    %v32 = vadd.f32 %v31, 0.5
    %v33 = vmul.f32 %v32, 0.0625
    %v34 = vfloor.f32 %v33
    %v35 = vcvt.f32.s32.to.zero.pseudo %v34
    %v36 = vmul.u32 %v35, 16
    %v37 = vsub.s32 %v30, %v36
    %vm38 = vcmp.ge.s32.totalorder %v37, 16
    %vm39 = vcmp.lt.s32.totalorder %v37, 0
    %v40 = vadd.s32 %v35, 1
    %v41 = vsel %vm38, %v40, %v35
    %v42 = vsub.s32 %v37, 16
    %v43 = vsel %vm38, %v42, %v37
    %v44 = vsub.s32 %v41, 1
    %v45 = vsel %vm39, %v44, %v41
    %v46 = vadd.s32 %v43, 16
    %v47 = vsel %vm39, %v46, %v43
    %v48 = vcvt.s32.f32 %v45
    %v49 = vmul.f32 %v48, 0.13333334
    %v50 = vsub.f32 %v49, 1.0
    %v51 = vcvt.s32.f32 %v47
    %v52 = vmul.f32 %v51, 0.13333334
    %v53 = vsub.f32 %v52, 1.0
    %s54 = sld [smem:[#allocation2]]
    %s55 = sld [smem:[#allocation2 + $0x1]]
    %s56 = sld [smem:[#allocation2 + $0x2]]
    %s57 = sld [smem:[#allocation2 + $0x9]]
    %v58 = vstv %s54
    %v59 = vmul.f32 %v58, %v50
    %v60 = vstv %s55
    %v61 = vmul.f32 %v60, %v53
    %v62 = vadd.f32 %v59, %v61
    %v63 = vstv %s57
    %v64 = vadd.f32 %v62, %v63
    %65 = vst [vmem:[#allocation5] sm:$0xff] %v64
    %v66 = vstv %s56
    %s67 = scalar_lea.vmem [#allocation5], 24
    %68 = vst [vmem:[%s67] sm:$0xff] %v66
    %s69 = sld [smem:[#allocation2 + $0x3]]
    %s70 = sld [smem:[#allocation2 + $0x4]]
    %s71 = sld [smem:[#allocation2 + $0x5]]
    %s72 = sld [smem:[#allocation2 + $0xa]]
    %v73 = vstv %s69
    %v74 = vmul.f32 %v73, %v50
    %v75 = vstv %s70
    %v76 = vmul.f32 %v75, %v53
    %v77 = vadd.f32 %v74, %v76
    %v78 = vstv %s72
    %v79 = vadd.f32 %v77, %v78
    %s80 = scalar_lea.vmem [#allocation5], 8
    %81 = vst [vmem:[%s80] sm:$0xff] %v79
    %v82 = vstv %s71
    %s83 = scalar_lea.vmem [#allocation5], 32
    %84 = vst [vmem:[%s83] sm:$0xff] %v82
    %s85 = sld [smem:[#allocation2 + $0x6]]
    %s86 = sld [smem:[#allocation2 + $0x7]]
    %s87 = sld [smem:[#allocation2 + $0x8]]
    %s88 = sld [smem:[#allocation2 + $0xb]]
    %v89 = vstv %s85
    %v90 = vmul.f32 %v89, %v50
    %v91 = vstv %s86
    %v92 = vmul.f32 %v91, %v53
    %v93 = vadd.f32 %v90, %v92
    %v94 = vstv %s88
    %v95 = vadd.f32 %v93, %v94
    %s96 = scalar_lea.vmem [#allocation5], 16
    %97 = vst [vmem:[%s96] sm:$0xff] %v95
    %v98 = vstv %s87
    %s99 = scalar_lea.vmem [#allocation5], 40
    %100 = vst [vmem:[%s99] sm:$0xff] %v98
    // Predicated region
    $region10: #{tpu_custom_call.1} parent=1 // pred_check
      _
    $region11: #{tpu_custom_call.1} parent=1 // pred_check_branch
      %102 = sbr.rel (0) target = $region13
    $region12: #{tpu_custom_call.1} parent=1 // pred_region
      %104 = vsyncadd [#allocation3], 0
      %s105 = sshll.u32 [#allocation5], 4
      %s106 = int_to_ptr.vmem [resolvable:$true] %s105
      %s107 = sshll.u32 %s1, 4
      %s108 = int_to_ptr.hbm [resolvable:$true] %s107
      %113 = dma.vmem_to_hbm [thread:$0]  %s106, 768, %s108, [#allocation3], 128, 128, 8
    $region13: #{tpu_custom_call.1} parent=1 // pred_fallthru
      _
    // Predicated region
    $region14: #{tpu_custom_call.1} parent=1 // pred_check
      _
    $region15: #{tpu_custom_call.1} parent=1 // pred_check_branch
      %115 = sbr.rel (0) target = $region17
    $region16: #{tpu_custom_call.1} parent=1 // pred_region
      %117 = dma.done [#allocation3], 768
    $region17: #{tpu_custom_call.1} parent=1 // pred_fallthru
      _
    %118 = vsyncpa [#allocation3], 1
    %119 = vsyncpa [#allocation4], 1

</llo_original>
